<compile_context>
chip_gen: v7x
topology: tpu7x:2x2x1
jax: 0.10.0
libtpu: 0.0.40
codegen_flags: <defaults>
</compile_context>

<pallas_src>
import functools

import jax
import jax.numpy as jnp
from jax.experimental import pallas as pl
from jax.experimental.pallas import tpu as pltpu


def _round_up(x, m):
    return (x + m - 1) // m * m


def _log_sigmoid(x):
    # numerically stable logsigmoid = min(x, 0) - log1p(exp(-|x|))
    return jnp.minimum(x, 0.0) - jnp.log1p(jnp.exp(-jnp.abs(x)))


def _l2_normalize(x, eps=1e-12):
    return x * jax.lax.rsqrt(jnp.maximum(jnp.sum(x * x, axis=-1, keepdims=True), eps))


def _bpr_rowloss_kernel(text_ref, pos_ref, neg_ref, out_ref, *, neg_count):
    """One batch tile.

    text_ref: (TB, Dp) raw text embeddings (any dtype).
    pos_ref : (TB, Dp) pre-normalized ctr rows at the same batch indices (f32).
    neg_ref : (K, TB, Dp) pre-normalized gathered negative ctr rows (f32).
    out_ref : (TB, 128) per-row sum_k logsigmoid(pos - neg), lane-broadcast.
    """
    eps = 1e-12

    # Normalize the text tile only (each row visited exactly once across the grid).
    t = text_ref[...].astype(jnp.float32)
    t_n = t * jax.lax.rsqrt(jnp.maximum(jnp.sum(t * t, axis=-1, keepdims=True), eps))

    # Positive score: row-wise dot against the same-index (pre-normalized) ctr tile.
    p = pos_ref[...].astype(jnp.float32)
    pos = jnp.sum(t_n * p, axis=-1, keepdims=True)              # (TB, 1)

    # mode == 'max' for cosine; the original `if self.mode == min:` branch never
    # fires (string vs builtin comparison), so no negation.  dns == False path.
    acc = jnp.zeros_like(pos)
    for k in range(neg_count):                                   # K static & small
        n_k = neg_ref[k].astype(jnp.float32)                     # (TB, Dp), static index
        neg = jnp.sum(t_n * n_k, axis=-1, keepdims=True)         # (TB, 1)
        acc = acc + _log_sigmoid(pos - neg)

    # Lane-dense store: broadcast the per-row column across 128 lanes so the
    # store is a full unmasked vst (wrapper reads column 0).
    out_ref[...] = jnp.broadcast_to(acc, out_ref.shape)


def bpr_loss_pallas(text_emb, ctr_emb, neg_idx, *, block_b=None):
    """text_emb [B,D], ctr_emb [B,D], neg_idx [B,K] int -> scalar mean BPR loss."""
    B, D = text_emb.shape
    assert ctr_emb.shape == (B, D)
    assert jnp.issubdtype(neg_idx.dtype, jnp.integer)
    K = neg_idx.shape[-1]
    assert neg_idx.shape == (B, K)

    Dp = _round_up(D, 128)                        # lane-dense feature axis

    # Batch-tile size: bound double-buffered f32 input tiles to ~24 MiB so the
    # kernel fits comfortably under v7x's 64 MiB/TC as well as v5e/v6e.
    if block_b is None:
        per_row_bytes = 2 * (K + 2) * Dp * 4
        TB = (24 * 1024 * 1024) // per_row_bytes
        TB = max(8, min(512, (TB // 8) * 8))
    else:
        TB = _round_up(block_b, 8)
    TB = min(TB, _round_up(B, 8))
    Bp = _round_up(B, TB)
    num_tiles = Bp // TB

    # Pre-normalize ctr ONCE (f32), pad the feature axis lane-dense.
    ctr_n = _l2_normalize(ctr_emb.astype(jnp.float32))
    ctr_n = jnp.pad(ctr_n, ((0, 0), (0, Dp - D)))                 # [B, Dp]

    # Gather the K in-batch negative rows per example (already normalized) and
    # lay them out [K, B, Dp] so each kernel tile is a clean (K, TB, Dp) block.
    # TODO(synk): for very large B, move this gather in-kernel (scalar-prefetch
    # neg_idx + per-tile DMA) to avoid the extra [K,B,D] HBM round trip.
    neg_n = jnp.take(ctr_n, neg_idx.astype(jnp.int32), axis=0)    # [B, K, Dp]
    neg_n = jnp.transpose(neg_n, (1, 0, 2))                       # [K, B, Dp]

    pad_b = Bp - B
    text_p = jnp.pad(text_emb, ((0, pad_b), (0, Dp - D)))
    pos_p = jnp.pad(ctr_n, ((0, pad_b), (0, 0)))
    neg_p = jnp.pad(neg_n, ((0, 0), (0, pad_b), (0, 0)))

    kernel = functools.partial(_bpr_rowloss_kernel, neg_count=K)

    in_bytes = (text_p.size * text_p.dtype.itemsize
                + pos_p.size * 4 + neg_p.size * 4)
    cost = pl.CostEstimate(
        flops=2 * (K + 3) * Bp * Dp,              # text renorm + (K+1) row dots
        transcendentals=Bp * (1 + 2 * K),         # rsqrt + K * (exp, log1p)
        bytes_accessed=in_bytes + Bp * 128 * 4,
    )

    # VMEM: double-buffered input tiles + double-buffered output tile + headroom.
    tile_bytes = TB * Dp * (text_p.dtype.itemsize + 4 + 4 * K)
    vmem_bytes = 2 * tile_bytes + 2 * TB * 128 * 4 + (4 << 20)
    vmem_bytes = int(min(max(vmem_bytes, 16 << 20), 56 << 20))    # fits v7x 64 MiB/TC

    out = pl.pallas_call(
        kernel,
        out_shape=jax.ShapeDtypeStruct((Bp, 128), jnp.float32),
        grid=(num_tiles,),
        in_specs=[
            pl.BlockSpec((TB, Dp), lambda i: (i, 0)),        # text tile (raw)
            pl.BlockSpec((TB, Dp), lambda i: (i, 0)),        # same-index normalized ctr tile
            pl.BlockSpec((K, TB, Dp), lambda i: (0, i, 0)),  # gathered normalized negatives
        ],
        out_specs=pl.BlockSpec((TB, 128), lambda i: (i, 0)),
        compiler_params=pltpu.CompilerParams(
            dimension_semantics=("parallel",),               # megacore-shardable on v7x
            vmem_limit_bytes=vmem_bytes,
        ),
        cost_estimate=cost,
    )(text_p, pos_p, neg_p)                                   # [Bp, 128]; col 0 is the row sum

    # final_loss_i = -(1/K) * sum_k logsigmoid(...); reduction == 'mean' over B.
    # 1/K and 1/B folded into one scalar; padded rows sliced off.
    return -jnp.sum(out[:B, 0]) / (B * K)


def sample_negative_indices(batch_size, key, neg_count):
    """Mirror of BPRLoss.sample(): uniform in-batch negatives excluding the positive row."""
    neg_idx = jax.random.randint(key, (batch_size, neg_count), 0, batch_size - 1)
    pos_idx = jnp.arange(batch_size)[:, None]
    neg_idx = jnp.where(neg_idx >= pos_idx, neg_idx + 1, neg_idx)
    return neg_idx.astype(jnp.int32)


def bpr_loss_reference(text_emb, ctr_emb, neg_idx):
    """Pure-JAX reference matching the PyTorch module (cos, dns=False, mean)."""
    neg_emb = ctr_emb[neg_idx]                          # [B, K, D]
    t_n, c_n, n_n = (_l2_normalize(text_emb), _l2_normalize(ctr_emb),
                     _l2_normalize(neg_emb))
    pos = jnp.sum(t_n * c_n, -1)                        # [B]
    neg = jnp.sum(t_n[:, None, :] * n_n, -1)            # [B, K]
    loss = _log_sigmoid(pos[:, None] - neg)
    final = -jnp.mean(loss, axis=-1)                    # softmax(ones) == uniform 1/K
    return jnp.mean(final)


# TODO(synk): the dns=True branch (-logsigmoid(pos - max_k neg)) is not implemented;
# the module's defaults (dns=False) are what this kernel covers.

if __name__ == "__main__":
    key = jax.random.PRNGKey(0)

    cases = [
        # (B, D, K, block_b): D=32 exercises lane padding; second case exercises
        # a multi-tile grid with a padded (ragged) last batch tile.
        (8, 32, 2, None),
        (12, 48, 3, 8),
    ]
    for (B, D, K, bb) in cases:
        key, k_text, k_ctr, k_neg = jax.random.split(key, 4)
        text_emb = jax.random.normal(k_text, (B, D), dtype=jnp.float32)
        ctr_emb = jax.random.normal(k_ctr, (B, D), dtype=jnp.float32)
        neg_idx = sample_negative_indices(B, k_neg, K)

        loss = bpr_loss_pallas(text_emb, ctr_emb, neg_idx, block_b=bb)
        loss = jax.block_until_ready(loss)

        ref = bpr_loss_reference(text_emb, ctr_emb, neg_idx)
        assert jnp.allclose(loss, ref, atol=1e-5, rtol=1e-5), (B, D, K, float(loss), float(ref))

    print("KERNEL_OK")
</pallas_src>

<mosaic_0001>
module attributes {stable_mosaic.version = 11 : i64} {
  func.func @_bpr_rowloss_kernel(%arg0: i32, %arg1: memref<8x128xf32, #tpu.memory_space<vmem>>, %arg2: memref<8x128xf32, #tpu.memory_space<vmem>>, %arg3: memref<2x8x128xf32, #tpu.memory_space<vmem>>, %arg4: memref<8x128xf32, #tpu.memory_space<vmem>>) attributes {dimension_semantics = [#tpu.dimension_semantics<parallel>], iteration_bounds = array<i64: 1>, scalar_prefetch = 0 : i64, scratch_operands = 0 : i64, tpu.core_type = #tpu.core_type<tc>, window_params = [{transform_indices = @transform_0, window_bounds = array<i64: 8, 128>}, {transform_indices = @transform_1, window_bounds = array<i64: 8, 128>}, {transform_indices = @transform_2, window_bounds = array<i64: 2, 8, 128>}, {transform_indices = @transform_3, window_bounds = array<i64: 8, 128>}]} {
    %c0 = arith.constant 0 : index
    %c0_0 = arith.constant 0 : index
    %0 = vector.load %arg1[%c0, %c0_0] : memref<8x128xf32, #tpu.memory_space<vmem>>, vector<8x128xf32>
    %1 = arith.mulf %0, %0 : vector<8x128xf32>
    %cst = arith.constant dense<0.000000e+00> : vector<8xf32>
    %2 = vector.multi_reduction <add>, %1, %cst [1] : vector<8x128xf32> to vector<8xf32>
    %3 = vector.shape_cast %2 : vector<8xf32> to vector<8x1xf32>
    %cst_1 = arith.constant 9.99999996E-13 : f32
    %4 = vector.broadcast %cst_1 : f32 to vector<8x1xf32>
    %5 = arith.maximumf %3, %4 : vector<8x1xf32>
    %6 = math.rsqrt %5 : vector<8x1xf32>
    %7 = vector.broadcast %6 : vector<8x1xf32> to vector<8x128xf32>
    %8 = arith.mulf %0, %7 : vector<8x128xf32>
    %c0_2 = arith.constant 0 : index
    %c0_3 = arith.constant 0 : index
    %9 = vector.load %arg2[%c0_2, %c0_3] : memref<8x128xf32, #tpu.memory_space<vmem>>, vector<8x128xf32>
    %10 = arith.mulf %8, %9 : vector<8x128xf32>
    %cst_4 = arith.constant dense<0.000000e+00> : vector<8xf32>
    %11 = vector.multi_reduction <add>, %10, %cst_4 [1] : vector<8x128xf32> to vector<8xf32>
    %12 = vector.shape_cast %11 : vector<8xf32> to vector<8x1xf32>
    %cst_5 = arith.constant 0.000000e+00 : f32
    %13 = vector.broadcast %cst_5 : f32 to vector<8x1xf32>
    %c0_6 = arith.constant 0 : index
    %c0_7 = arith.constant 0 : index
    %c0_8 = arith.constant 0 : index
    %14 = vector.load %arg3[%c0_6, %c0_7, %c0_8] : memref<2x8x128xf32, #tpu.memory_space<vmem>>, vector<1x8x128xf32>
    %15 = vector.shape_cast %14 : vector<1x8x128xf32> to vector<8x128xf32>
    %16 = arith.mulf %8, %15 : vector<8x128xf32>
    %cst_9 = arith.constant dense<0.000000e+00> : vector<8xf32>
    %17 = vector.multi_reduction <add>, %16, %cst_9 [1] : vector<8x128xf32> to vector<8xf32>
    %18 = vector.shape_cast %17 : vector<8xf32> to vector<8x1xf32>
    %19 = arith.subf %12, %18 : vector<8x1xf32>
    %cst_10 = arith.constant 0.000000e+00 : f32
    %20 = vector.broadcast %cst_10 : f32 to vector<8x1xf32>
    %21 = arith.minimumf %19, %20 : vector<8x1xf32>
    %22 = math.absf %19 : vector<8x1xf32>
    %cst_11 = arith.constant 0.000000e+00 : f32
    %23 = vector.broadcast %cst_11 : f32 to vector<8x1xf32>
    %24 = arith.subf %23, %22 : vector<8x1xf32>
    %25 = math.exp %24 : vector<8x1xf32>
    %26 = math.log1p %25 : vector<8x1xf32>
    %27 = arith.subf %21, %26 : vector<8x1xf32>
    %28 = arith.addf %13, %27 : vector<8x1xf32>
    %c1 = arith.constant 1 : index
    %c0_12 = arith.constant 0 : index
    %c0_13 = arith.constant 0 : index
    %29 = vector.load %arg3[%c1, %c0_12, %c0_13] : memref<2x8x128xf32, #tpu.memory_space<vmem>>, vector<1x8x128xf32>
    %30 = vector.shape_cast %29 : vector<1x8x128xf32> to vector<8x128xf32>
    %31 = arith.mulf %8, %30 : vector<8x128xf32>
    %cst_14 = arith.constant dense<0.000000e+00> : vector<8xf32>
    %32 = vector.multi_reduction <add>, %31, %cst_14 [1] : vector<8x128xf32> to vector<8xf32>
    %33 = vector.shape_cast %32 : vector<8xf32> to vector<8x1xf32>
    %34 = arith.subf %12, %33 : vector<8x1xf32>
    %cst_15 = arith.constant 0.000000e+00 : f32
    %35 = vector.broadcast %cst_15 : f32 to vector<8x1xf32>
    %36 = arith.minimumf %34, %35 : vector<8x1xf32>
    %37 = math.absf %34 : vector<8x1xf32>
    %cst_16 = arith.constant 0.000000e+00 : f32
    %38 = vector.broadcast %cst_16 : f32 to vector<8x1xf32>
    %39 = arith.subf %38, %37 : vector<8x1xf32>
    %40 = math.exp %39 : vector<8x1xf32>
    %41 = math.log1p %40 : vector<8x1xf32>
    %42 = arith.subf %36, %41 : vector<8x1xf32>
    %43 = arith.addf %28, %42 : vector<8x1xf32>
    %44 = vector.shape_cast %43 : vector<8x1xf32> to vector<8x1xf32>
    %45 = vector.broadcast %44 : vector<8x1xf32> to vector<8x128xf32>
    %c0_17 = arith.constant 0 : index
    %c0_18 = arith.constant 0 : index
    %46 = vector.load %arg4[%c0_17, %c0_18] : memref<8x128xf32, #tpu.memory_space<vmem>>, vector<8x128xf32>
    tpu.vector_store %arg4[%c0_17, %c0_18], %45 {strides = array<i32>} : memref<8x128xf32, #tpu.memory_space<vmem>>, vector<8x128xf32>,
    return
  }
  func.func @transform_0(%arg0: i32) -> (i32, i32) {
    %c0_i32 = arith.constant 0 : i32
    %c0_i32_0 = arith.constant 0 : i32
    return %arg0, %c0_i32 : i32, i32
  }
  func.func @transform_1(%arg0: i32) -> (i32, i32) {
    %c0_i32 = arith.constant 0 : i32
    %c0_i32_0 = arith.constant 0 : i32
    return %arg0, %c0_i32 : i32, i32
  }
  func.func @transform_2(%arg0: i32) -> (i32, i32, i32) {
    %c0_i32 = arith.constant 0 : i32
    %c0_i32_0 = arith.constant 0 : i32
    %c0_i32_1 = arith.constant 0 : i32
    return %c0_i32, %arg0, %c0_i32_0 : i32, i32, i32
  }
  func.func @transform_3(%arg0: i32) -> (i32, i32) {
    %c0_i32 = arith.constant 0 : i32
    %c0_i32_0 = arith.constant 0 : i32
    return %arg0, %c0_i32 : i32, i32
  }
}

</mosaic_0001>

<llo_original>
// kernel: tpu_custom_call.1
$region0: #{tpu_custom_call.1}
  #allocation0 [shape = 'u32[]', space=smem, size = 0x4, offset = 0x4, fixed_abs, tag = 'smem constant byte address 0x4 - core index']
  #allocation1 [shape = 'u32[144,128]{1,0:T(1,128)}', space=vmem, size = 0x12000, scoped, tag = 'internal scratch']
  %s0 = inlined_call_operand.hbm [shape: f32[8,128], index: 0, kind: input, shape index: {}]
  %s1 = inlined_call_operand.hbm [shape: f32[8,128], index: 1, kind: input, shape index: {}]
  %s2 = inlined_call_operand.hbm [shape: f32[2,8,128], index: 2, kind: input, shape index: {}]
  %s3 = inlined_call_operand.hbm [shape: f32[8,128], index: 3, kind: output, shape index: {}]
  %s4 = sld [smem:[#allocation0]]
  $region34: #{tpu_custom_call.1} parent=0
    _
  %s6 = ssub.s32 1, %s4
  %s7 = scalar_select 0, %s6, %s4
  $region1: #{tpu_custom_call.1} parent=0
    #allocation2 [shape = 'u8[4096]{0}', space=vmem, size = 0x1000, scoped, tag = 'input window, operand 0, single buffered']
    #allocation3 [shape = 's32[1]{0}', space=sflag, size = 0x4, scoped, tag = 'scoped memory for tpu_custom_call.1']
    #allocation4 [shape = 's32[1]{0}', space=sflag, size = 0x4, scoped, tag = 'scoped memory for tpu_custom_call.1']
    #allocation5 [shape = 'u8[4096]{0}', space=vmem, size = 0x1000, scoped, tag = 'input window, operand 1, single buffered']
    #allocation6 [shape = 's32[1]{0}', space=sflag, size = 0x4, scoped, tag = 'scoped memory for tpu_custom_call.1']
    #allocation7 [shape = 'u8[8192]{0}', space=vmem, size = 0x2000, scoped, tag = 'input window, operand 2, single buffered']
    #allocation8 [shape = 'u8[4096]{0}', space=vmem, size = 0x1000, scoped, tag = 'output window, operand 0, single buffered']
    %8 = vsyncpa [#allocation3], 0
    %9 = vsyncpa [#allocation6], 0
    %10 = vsyncpa [#allocation4], 0
    // Predicated region
    $region2: #{tpu_custom_call.1} parent=1 // pred_check
      _
    $region3: #{tpu_custom_call.1} parent=1 // pred_check_branch
      %12 = sbr.rel (0) target = $region5
    $region4: #{tpu_custom_call.1} parent=1 // pred_region
      %s14 = ssub.s32 128, 128
      %15 = vsyncadd [#allocation3], %s14
      %s17 = sshll.u32 [#allocation2], 4
      %s18 = int_to_ptr.vmem [resolvable:$true] %s17
      %20 = dma.hbm_to_vmem [thread:$0]  %s0, 128, %s18, [#allocation3]
    $region5: #{tpu_custom_call.1} parent=1 // pred_fallthru
      _
    // Predicated region
    $region6: #{tpu_custom_call.1} parent=1 // pred_check
      _
    $region7: #{tpu_custom_call.1} parent=1 // pred_check_branch
      %22 = sbr.rel (0) target = $region9
    $region8: #{tpu_custom_call.1} parent=1 // pred_region
      %s24 = ssub.s32 128, 128
      %25 = vsyncadd [#allocation6], %s24
      %s27 = sshll.u32 [#allocation5], 4
      %s28 = int_to_ptr.vmem [resolvable:$true] %s27
      %30 = dma.hbm_to_vmem [thread:$0]  %s1, 128, %s28, [#allocation6]
    $region9: #{tpu_custom_call.1} parent=1 // pred_fallthru
      _
    // Predicated region
    $region10: #{tpu_custom_call.1} parent=1 // pred_check
      _
    $region11: #{tpu_custom_call.1} parent=1 // pred_check_branch
      %32 = sbr.rel (0) target = $region13
    $region12: #{tpu_custom_call.1} parent=1 // pred_region
      %s34 = ssub.s32 256, 256
      %35 = vsyncadd [#allocation6], %s34
      %s36 = sshll.u32 [#allocation7], 4
      %s37 = int_to_ptr.vmem [resolvable:$true] %s36
      %42 = dma.hbm_to_vmem [thread:$0]  %s2, 256, %s37, [#allocation6], 128, 128, 8
    $region13: #{tpu_custom_call.1} parent=1 // pred_fallthru
      _
    // Predicated region
    $region14: #{tpu_custom_call.1} parent=1 // pred_check
      _
    $region15: #{tpu_custom_call.1} parent=1 // pred_check_branch
      %44 = sbr.rel (0) target = $region17
    $region16: #{tpu_custom_call.1} parent=1 // pred_region
      %45 = dma.done [#allocation3], 128
    $region17: #{tpu_custom_call.1} parent=1 // pred_fallthru
      _
    // Predicated region
    $region18: #{tpu_custom_call.1} parent=1 // pred_check
      _
    $region19: #{tpu_custom_call.1} parent=1 // pred_check_branch
      %47 = sbr.rel (0) target = $region21
    $region20: #{tpu_custom_call.1} parent=1 // pred_region
      %48 = dma.done [#allocation6], 128
    $region21: #{tpu_custom_call.1} parent=1 // pred_fallthru
      _
    // Predicated region
    $region22: #{tpu_custom_call.1} parent=1 // pred_check
      _
    $region23: #{tpu_custom_call.1} parent=1 // pred_check_branch
      %50 = sbr.rel (0) target = $region25
    $region24: #{tpu_custom_call.1} parent=1 // pred_region
      %51 = dma.done [#allocation6], 256
    $region25: #{tpu_custom_call.1} parent=1 // pred_fallthru
      _
    %v52 = vld [vmem:[#allocation2] sm:$0xff]
    %v53 = vmul.f32 %v52, %v52
    %54 = vadd.xlane.f32.xlu0 %v53
    %v55 = vpop.xlane.xlu0 %54
    %v56 = vmax.f32 %v55, 1e-12
    %v57 = vrsqrt.pop %v56
    %v58 = vmul.f32 %v52, %v57
    %v59 = vld [vmem:[#allocation5] sm:$0xff]
    %v60 = vmul.f32 %v58, %v59
    %61 = vadd.xlane.f32.xlu0 %v60
    %v62 = vpop.xlane.xlu0 %61
    %v63 = vld [vmem:[#allocation7] sm:$0xff]
    %v64 = vmul.f32 %v58, %v63
    %65 = vadd.xlane.f32.xlu0 %v64
    %v66 = vpop.xlane.xlu0 %65
    %v67 = vsub.f32 %v62, %v66
    %v68 = vmin.f32 %v67, 0.0
    %v69 = vand.u32 2147483647, %v67
    %v70 = vsub.f32 0.0, %v69
    %v71 = vmul.f32 %v70, 1.442695
    %v72 = vpow.pop %v71
    %v73 = vadd.f32 %v72, 1.0
    %v74 = vlog2.pop %v73
    %v75 = vmul.f32 %v74, 0.6931472
    %v76 = vmul.f32 -0.5, %v72
    %v77 = vadd.f32 %v76, 1.0
    %v78 = vmul.f32 %v77, %v72
    %v79 = vand.u32 2147483647, %v72
    %vm80 = vcmp.lt.f32.partialorder %v79, 0.0004427343
    %v81 = vsel %vm80, %v78, %v75
    %v82 = vsub.f32 %v68, %v81
    %v83 = vadd.f32 %v82, 0.0
    %s84 = scalar_lea.vmem [#allocation7], 8
    %v85 = vld [vmem:[%s84] sm:$0xff]
    %v86 = vmul.f32 %v58, %v85
    %87 = vadd.xlane.f32.xlu0 %v86
    %v88 = vpop.xlane.xlu0 %87
    %v89 = vsub.f32 %v62, %v88
    %v90 = vmin.f32 %v89, 0.0
    %v91 = vand.u32 2147483647, %v89
    %v92 = vsub.f32 0.0, %v91
    %v93 = vmul.f32 %v92, 1.442695
    %v94 = vpow.pop %v93
    %v95 = vadd.f32 %v94, 1.0
    %v96 = vlog2.pop %v95
    %v97 = vmul.f32 %v96, 0.6931472
    %v98 = vmul.f32 -0.5, %v94
    %v99 = vadd.f32 %v98, 1.0
    %v100 = vmul.f32 %v99, %v94
    %v101 = vand.u32 2147483647, %v94
    %vm102 = vcmp.lt.f32.partialorder %v101, 0.0004427343
    %v103 = vsel %vm102, %v100, %v97
    %v104 = vsub.f32 %v90, %v103
    %v105 = vadd.f32 %v83, %v104
    %106 = vst [vmem:[#allocation8] sm:$0xff] %v105
    // Predicated region
    $region26: #{tpu_custom_call.1} parent=1 // pred_check
      _
    $region27: #{tpu_custom_call.1} parent=1 // pred_check_branch
      %108 = sbr.rel (0) target = $region29
    $region28: #{tpu_custom_call.1} parent=1 // pred_region
      %s110 = ssub.s32 128, 128
      %111 = vsyncadd [#allocation4], %s110
      %s113 = sshll.u32 [#allocation8], 4
      %s114 = int_to_ptr.vmem [resolvable:$true] %s113
      %116 = dma.vmem_to_hbm [thread:$0]  %s114, 128, %s3, [#allocation4]
    $region29: #{tpu_custom_call.1} parent=1 // pred_fallthru
      _
    // Predicated region
    $region30: #{tpu_custom_call.1} parent=1 // pred_check
      _
    $region31: #{tpu_custom_call.1} parent=1 // pred_check_branch
      %118 = sbr.rel (0) target = $region33
    $region32: #{tpu_custom_call.1} parent=1 // pred_region
      %119 = dma.done [#allocation4], 128
    $region33: #{tpu_custom_call.1} parent=1 // pred_fallthru
      _
    %120 = vsyncpa [#allocation3], 1
    %121 = vsyncpa [#allocation6], 1
    %122 = vsyncpa [#allocation4], 1

</llo_original>
